<compile_context>
chip_gen: v5e
topology: v5e:2x2
jax: 0.10.0
libtpu: 0.0.40
codegen_flags: <defaults>
</compile_context>

<pallas_src>
import functools

import jax
import jax.numpy as jnp
import numpy as np
from jax.experimental import pallas as pl
from jax.experimental.pallas import tpu as pltpu


def cnn_forward_kernel(x_ref, w_conv_ref, w_att_ref, vec_ref, w_fc_ref, out_ref,
                       *, B, L):
    BL, Cin = x_ref.shape                    # BL == B * L
    H = w_att_ref.shape[0]
    ncls = w_fc_ref.shape[1]
    eps = 1e-5

    # --- single small load of all packed per-channel vectors -------------------
    vecs = vec_ref[...]                      # (8, H)
    b_conv = vecs[0:1, :]
    b_att = vecs[1:2, :]
    gamma = vecs[2:3, :]
    beta = vecs[3:4, :]
    b_fc = vecs[4:5, :ncls]                  # (1, ncls)

    # --- Conv1d(C_in -> H, kernel_size=3, padding=1) ---------------------------
    # Shifted slabs built with XLU rolls + a VPU row mask (no concat copies).
    # x_prev[t] = x[t-1] (0 at the first row of each batch), x_next[t] = x[t+1]
    # (0 at the last row of each batch); the roll wraps across batch boundaries
    # but those rows are exactly the masked ones.
    x = x_ref[...]                                               # (B*L, Cin)
    t = jax.lax.broadcasted_iota(jnp.int32, (BL, Cin), 0) % L    # time-in-batch
    x_prev = jnp.where(t == 0, 0.0, pltpu.roll(x, shift=1, axis=0))
    x_next = jnp.where(t == L - 1, 0.0, pltpu.roll(x, shift=BL - 1, axis=0))

    conv = (jnp.dot(x_prev, w_conv_ref[0], preferred_element_type=jnp.float32)
            + jnp.dot(x, w_conv_ref[1], preferred_element_type=jnp.float32)
            + jnp.dot(x_next, w_conv_ref[2], preferred_element_type=jnp.float32)
            + b_conv)                                            # (B*L, H)
    conv3 = conv.reshape(B, L, H)                                # == "lstm_out"

    # --- Attention: linear -> batched scores -> softmax -> batched context -----
    lin = jnp.dot(conv, w_att_ref[...],
                  preferred_element_type=jnp.float32) + b_att    # (B*L, H)
    lin3 = lin.reshape(B, L, H)
    score = jnp.einsum('bqh,bkh->bqk', lin3, lin3,
                       preferred_element_type=jnp.float32)       # (B, L, L)
    score = score - jnp.max(score, axis=-1, keepdims=True)
    e = jnp.exp(score)
    attn = e * pl.reciprocal(jnp.sum(e, axis=-1, keepdims=True), approx=True)
    ctx = jnp.einsum('bqk,bkh->bqh', attn, conv3,
                     preferred_element_type=jnp.float32)         # (B, L, H)

    # --- BatchNorm1d(H): training-mode batch stats over (B, L), biased var -----
    # Two-pass mean/var (no E[x^2] - mean^2 cancellation).
    ctx2 = ctx.reshape(BL, H)
    inv_n = 1.0 / float(BL)
    mean = jnp.sum(ctx2, axis=0, keepdims=True) * inv_n          # (1, H)
    centered = ctx2 - mean
    var = jnp.sum(centered * centered, axis=0, keepdims=True) * inv_n
    inv_std = jax.lax.rsqrt(var + eps)
    scale = gamma * inv_std                                      # (1, H)
    shift = beta - mean * scale                                  # (1, H)

    # --- fc on the last time step only, one matmul, one full store -------------
    last = ctx[:, L - 1, :]                                      # (B, H)
    normed = last * scale + shift
    out_ref[...] = (jnp.dot(normed, w_fc_ref[...],
                            preferred_element_type=jnp.float32) + b_fc)


def prepare_params(params):
    """One-time (out of the hot path) weight re-layout / packing for the kernel."""
    H, Cin, _ = params["w_conv"].shape
    ncls = params["w_fc"].shape[0]
    assert ncls <= H, "b_fc is packed into an H-wide row"
    # Pack all the tiny per-channel vectors into one (8, H) slab -> one DMA.
    vecs = jnp.zeros((8, H), jnp.float32)
    vecs = vecs.at[0].set(params["b_conv"])
    vecs = vecs.at[1].set(params["b_att"])
    vecs = vecs.at[2].set(params["gamma"])
    vecs = vecs.at[3].set(params["beta"])
    vecs = vecs.at[4, :ncls].set(params["b_fc"])
    return dict(
        # (H, Cin, 3) -> (3, Cin, H): slab k multiplies x[t - 1 + k, c]
        w_conv=jnp.transpose(params["w_conv"], (2, 1, 0)),
        w_att=params["w_att"].T,                                 # (in, out)
        vecs=vecs,                                               # (8, H)
        w_fc=params["w_fc"].T,                                   # (H, ncls)
    )


@jax.jit
def cnn_forward(x, prepped):
    """x: (B, L, C_in) float32, prepped = prepare_params(params). -> (B, ncls)."""
    B, L, Cin = x.shape
    ncls = prepped["w_fc"].shape[1]
    x2 = x.reshape(B * L, Cin)               # free XLA-side reshape (contiguous)
    kernel = functools.partial(cnn_forward_kernel, B=B, L=L)
    inputs = (x2, prepped["w_conv"], prepped["w_att"], prepped["vecs"],
              prepped["w_fc"])
    return pl.pallas_call(
        kernel,
        out_shape=jax.ShapeDtypeStruct((B, ncls), jnp.float32),
        in_specs=[pl.BlockSpec(memory_space=pltpu.MemorySpace.VMEM)] * len(inputs),
        out_specs=pl.BlockSpec(memory_space=pltpu.MemorySpace.VMEM),
    )(*inputs)


def ref_forward(x, params, eps=1e-5):
    """Pure-JAX reference mirroring the PyTorch forward (for correctness check)."""
    w_conv, b_conv = params["w_conv"], params["b_conv"]           # (H, Cin, 3), (H,)
    w_att, b_att = params["w_att"], params["b_att"]               # (H, H), (H,)
    gamma, beta = params["gamma"], params["beta"]
    w_fc, b_fc = params["w_fc"], params["b_fc"]                   # (ncls, H), (ncls,)
    B, L, Cin = x.shape
    x_pad = jnp.pad(x, ((0, 0), (1, 1), (0, 0)))
    windows = jnp.stack([x_pad[:, k:k + L, :] for k in range(3)], axis=-1)  # (B,L,Cin,3)
    conv_out = jnp.einsum("blck,hck->blh", windows, w_conv) + b_conv        # (B,L,H)
    lin = jnp.einsum("blh,gh->blg", conv_out, w_att) + b_att
    score = jnp.einsum("blh,bmh->blm", lin, lin)
    attn = jax.nn.softmax(score, axis=-1)
    ctx = jnp.einsum("blm,bmh->blh", attn, conv_out)                        # (B,L,H)
    mean = jnp.mean(ctx, axis=(0, 1))
    var = jnp.var(ctx, axis=(0, 1))                                         # biased
    normed = (ctx - mean) / jnp.sqrt(var + eps) * gamma + beta
    return jnp.einsum("bh,ch->bc", normed[:, -1, :], w_fc) + b_fc


if __name__ == "__main__":
    # Small shapes consistent with the module: x is (batch, seq_len, input_size).
    B, L = 2, 8
    input_size, hidden_size, num_classes = 16, 32, 2
    # num_layers / drop are ctor args that never affect forward (dropout unused).

    key = jax.random.PRNGKey(0)
    ks = jax.random.split(key, 7)
    params = {
        "w_conv": 0.1 * jax.random.normal(ks[0], (hidden_size, input_size, 3), jnp.float32),
        "b_conv": 0.1 * jax.random.normal(ks[1], (hidden_size,), jnp.float32),
        "w_att":  0.1 * jax.random.normal(ks[2], (hidden_size, hidden_size), jnp.float32),
        "b_att":  0.1 * jax.random.normal(ks[3], (hidden_size,), jnp.float32),
        "gamma":  jnp.ones((hidden_size,), jnp.float32),   # BatchNorm default init
        "beta":   jnp.zeros((hidden_size,), jnp.float32),
        "w_fc":   0.1 * jax.random.normal(ks[4], (num_classes, hidden_size), jnp.float32),
        "b_fc":   0.1 * jax.random.normal(ks[5], (num_classes,), jnp.float32),
    }
    x = jax.random.normal(ks[6], (B, L, input_size), jnp.float32)

    prepped = jax.tree_util.tree_map(jax.block_until_ready, prepare_params(params))

    out = jax.block_until_ready(cnn_forward(x, prepped))
    ref = jax.block_until_ready(ref_forward(x, params))
    # Tolerance bounded by pl.reciprocal(approx=True) in the softmax denominator;
    # everything else is exact f32.
    np.testing.assert_allclose(np.asarray(out), np.asarray(ref), rtol=2e-3, atol=2e-3)
    print("KERNEL_OK")
</pallas_src>

<mosaic_0001>
module attributes {stable_mosaic.version = 11 : i64} {
  func.func @cnn_forward_kernel(%arg0: memref<16x16xf32, #tpu.memory_space<vmem>>, %arg1: memref<3x16x32xf32, #tpu.memory_space<vmem>>, %arg2: memref<32x32xf32, #tpu.memory_space<vmem>>, %arg3: memref<8x32xf32, #tpu.memory_space<vmem>>, %arg4: memref<32x2xf32, #tpu.memory_space<vmem>>, %arg5: memref<2x2xf32, #tpu.memory_space<vmem>>) attributes {dimension_semantics = [], scalar_prefetch = 0 : i64, scratch_operands = 0 : i64, tpu.core_type = #tpu.core_type<tc>} {
    %c0 = arith.constant 0 : index
    %c0_0 = arith.constant 0 : index
    %0 = vector.load %arg3[%c0, %c0_0] : memref<8x32xf32, #tpu.memory_space<vmem>>, vector<8x32xf32>
    %1 = vector.extract_strided_slice %0 {offsets = [0, 0], sizes = [1, 32], strides = [1, 1]} : vector<8x32xf32> to vector<1x32xf32>
    %2 = vector.extract_strided_slice %0 {offsets = [1, 0], sizes = [1, 32], strides = [1, 1]} : vector<8x32xf32> to vector<1x32xf32>
    %3 = vector.extract_strided_slice %0 {offsets = [2, 0], sizes = [1, 32], strides = [1, 1]} : vector<8x32xf32> to vector<1x32xf32>
    %4 = vector.extract_strided_slice %0 {offsets = [3, 0], sizes = [1, 32], strides = [1, 1]} : vector<8x32xf32> to vector<1x32xf32>
    %5 = vector.extract_strided_slice %0 {offsets = [4, 0], sizes = [1, 2], strides = [1, 1]} : vector<8x32xf32> to vector<1x2xf32>
    %c0_1 = arith.constant 0 : index
    %c0_2 = arith.constant 0 : index
    %6 = vector.load %arg0[%c0_1, %c0_2] : memref<16x16xf32, #tpu.memory_space<vmem>>, vector<16x16xf32>
    %7 = tpu.iota {dimensions = array<i32: 0>} : vector<16x16xi32>
    %c8_i32 = arith.constant 8 : i32
    %c0_i32 = arith.constant 0 : i32
    %8 = arith.cmpi eq, %c8_i32, %c0_i32 : i32
    %c1_i32 = arith.constant 1 : i32
    %9 = arith.select %8, %c1_i32, %c8_i32 : i32
    %10 = vector.broadcast %9 : i32 to vector<16x16xi32>
    %11 = arith.remsi %7, %10 : vector<16x16xi32>
    %c0_i32_3 = arith.constant 0 : i32
    %12 = vector.broadcast %c0_i32_3 : i32 to vector<16x16xi32>
    %13 = arith.cmpi ne, %11, %12 : vector<16x16xi32>
    %c0_i32_4 = arith.constant 0 : i32
    %14 = vector.broadcast %c0_i32_4 : i32 to vector<16x16xi32>
    %15 = arith.cmpi slt, %11, %14 : vector<16x16xi32>
    %c0_i32_5 = arith.constant 0 : i32
    %16 = arith.cmpi slt, %9, %c0_i32_5 : i32
    %17 = vector.broadcast %16 : i1 to vector<16x16xi1>
    %18 = vector.broadcast %17 : vector<16x16xi1> to vector<16x16xi1>
    %19 = arith.xori %15, %18 : vector<16x16xi1>
    %20 = arith.andi %19, %13 : vector<16x16xi1>
    %21 = vector.broadcast %9 : i32 to vector<16x16xi32>
    %22 = arith.addi %11, %21 : vector<16x16xi32>
    %23 = arith.select %20, %22, %11 : vector<16x16xi1>, vector<16x16xi32>
    %c0_i32_6 = arith.constant 0 : i32
    %24 = vector.broadcast %c0_i32_6 : i32 to vector<16x16xi32>
    %25 = arith.cmpi eq, %23, %24 : vector<16x16xi32>
    %c1_i32_7 = arith.constant 1 : i32
    %26 = tpu.dynamic_rotate %6 by %c1_i32_7 dim 0 : vector<16x16xf32>, i32 -> vector<16x16xf32>
    %cst = arith.constant 0.000000e+00 : f32
    %27 = vector.broadcast %cst : f32 to vector<16x16xf32>
    %28 = arith.select %25, %27, %26 : vector<16x16xi1>, vector<16x16xf32>
    %c7_i32 = arith.constant 7 : i32
    %29 = vector.broadcast %c7_i32 : i32 to vector<16x16xi32>
    %30 = arith.cmpi eq, %23, %29 : vector<16x16xi32>
    %c15_i32 = arith.constant 15 : i32
    %31 = tpu.dynamic_rotate %6 by %c15_i32 dim 0 : vector<16x16xf32>, i32 -> vector<16x16xf32>
    %cst_8 = arith.constant 0.000000e+00 : f32
    %32 = vector.broadcast %cst_8 : f32 to vector<16x16xf32>
    %33 = arith.select %30, %32, %31 : vector<16x16xi1>, vector<16x16xf32>
    %c0_9 = arith.constant 0 : index
    %c0_10 = arith.constant 0 : index
    %c0_11 = arith.constant 0 : index
    %34 = vector.load %arg1[%c0_9, %c0_10, %c0_11] : memref<3x16x32xf32, #tpu.memory_space<vmem>>, vector<1x16x32xf32>
    %35 = vector.shape_cast %34 : vector<1x16x32xf32> to vector<16x32xf32>
    %cst_12 = arith.constant dense<0.000000e+00> : vector<16x32xf32>
    %36 = tpu.matmul %28, %35, %cst_12 {dimension_numbers = #tpu.dot_dimension_numbers<[1], [0], [0], [1], [0, 0, 1, 1], [], []>} : vector<16x16xf32>, vector<16x32xf32>, vector<16x32xf32> -> vector<16x32xf32>
    %c1 = arith.constant 1 : index
    %c0_13 = arith.constant 0 : index
    %c0_14 = arith.constant 0 : index
    %37 = vector.load %arg1[%c1, %c0_13, %c0_14] : memref<3x16x32xf32, #tpu.memory_space<vmem>>, vector<1x16x32xf32>
    %38 = vector.shape_cast %37 : vector<1x16x32xf32> to vector<16x32xf32>
    %cst_15 = arith.constant dense<0.000000e+00> : vector<16x32xf32>
    %39 = tpu.matmul %6, %38, %cst_15 {dimension_numbers = #tpu.dot_dimension_numbers<[1], [0], [0], [1], [0, 0, 1, 1], [], []>} : vector<16x16xf32>, vector<16x32xf32>, vector<16x32xf32> -> vector<16x32xf32>
    %40 = arith.addf %36, %39 : vector<16x32xf32>
    %c2 = arith.constant 2 : index
    %c0_16 = arith.constant 0 : index
    %c0_17 = arith.constant 0 : index
    %41 = vector.load %arg1[%c2, %c0_16, %c0_17] : memref<3x16x32xf32, #tpu.memory_space<vmem>>, vector<1x16x32xf32>
    %42 = vector.shape_cast %41 : vector<1x16x32xf32> to vector<16x32xf32>
    %cst_18 = arith.constant dense<0.000000e+00> : vector<16x32xf32>
    %43 = tpu.matmul %33, %42, %cst_18 {dimension_numbers = #tpu.dot_dimension_numbers<[1], [0], [0], [1], [0, 0, 1, 1], [], []>} : vector<16x16xf32>, vector<16x32xf32>, vector<16x32xf32> -> vector<16x32xf32>
    %44 = arith.addf %40, %43 : vector<16x32xf32>
    %45 = vector.broadcast %1 : vector<1x32xf32> to vector<16x32xf32>
    %46 = arith.addf %44, %45 : vector<16x32xf32>
    %47 = vector.shape_cast %46 : vector<16x32xf32> to vector<2x8x32xf32>
    %c0_19 = arith.constant 0 : index
    %c0_20 = arith.constant 0 : index
    %48 = vector.load %arg2[%c0_19, %c0_20] : memref<32x32xf32, #tpu.memory_space<vmem>>, vector<32x32xf32>
    %cst_21 = arith.constant dense<0.000000e+00> : vector<16x32xf32>
    %49 = tpu.matmul %46, %48, %cst_21 {dimension_numbers = #tpu.dot_dimension_numbers<[1], [0], [0], [1], [0, 0, 1, 1], [], []>} : vector<16x32xf32>, vector<32x32xf32>, vector<16x32xf32> -> vector<16x32xf32>
    %50 = vector.broadcast %2 : vector<1x32xf32> to vector<16x32xf32>
    %51 = arith.addf %49, %50 : vector<16x32xf32>
    %52 = vector.shape_cast %51 : vector<16x32xf32> to vector<2x8x32xf32>
    "tpu.trace_start"() <{level = 10 : i32, message = "bqh,bkh->bqk"}> : () -> ()
    %cst_22 = arith.constant dense<0.000000e+00> : vector<2x8x8xf32>
    %53 = tpu.matmul %52, %52, %cst_22 {dimension_numbers = #tpu.dot_dimension_numbers<[2], [2], [1], [1], [0, 0, 0, 1, 1, 1], [0], [0]>} : vector<2x8x32xf32>, vector<2x8x32xf32>, vector<2x8x8xf32> -> vector<2x8x8xf32>
    "tpu.trace_stop"() : () -> ()
    %cst_23 = arith.constant dense<0xFF800000> : vector<2x8xf32>
    %54 = vector.multi_reduction <maximumf>, %53, %cst_23 [2] : vector<2x8x8xf32> to vector<2x8xf32>
    %55 = vector.shape_cast %54 : vector<2x8xf32> to vector<2x8x1xf32>
    %56 = vector.broadcast %55 : vector<2x8x1xf32> to vector<2x8x8xf32>
    %57 = arith.subf %53, %56 : vector<2x8x8xf32>
    %58 = math.exp %57 : vector<2x8x8xf32>
    %cst_24 = arith.constant dense<0.000000e+00> : vector<2x8xf32>
    %59 = vector.multi_reduction <add>, %58, %cst_24 [2] : vector<2x8x8xf32> to vector<2x8xf32>
    %60 = vector.shape_cast %59 : vector<2x8xf32> to vector<2x8x1xf32>
    %61 = tpu.reciprocal %60 {approx = true} : vector<2x8x1xf32> -> vector<2x8x1xf32>
    %62 = vector.broadcast %61 : vector<2x8x1xf32> to vector<2x8x8xf32>
    %63 = arith.mulf %58, %62 : vector<2x8x8xf32>
    "tpu.trace_start"() <{level = 10 : i32, message = "bqk,bkh->bqh"}> : () -> ()
    %cst_25 = arith.constant dense<0.000000e+00> : vector<2x8x32xf32>
    %64 = tpu.matmul %63, %47, %cst_25 {dimension_numbers = #tpu.dot_dimension_numbers<[2], [1], [1], [2], [0, 0, 0, 1, 1, 2], [0], [0]>} : vector<2x8x8xf32>, vector<2x8x32xf32>, vector<2x8x32xf32> -> vector<2x8x32xf32>
    "tpu.trace_stop"() : () -> ()
    %65 = vector.shape_cast %64 : vector<2x8x32xf32> to vector<16x32xf32>
    %cst_26 = arith.constant dense<0.000000e+00> : vector<32xf32>
    %66 = vector.multi_reduction <add>, %65, %cst_26 [0] : vector<16x32xf32> to vector<32xf32>
    %67 = vector.shape_cast %66 : vector<32xf32> to vector<1x32xf32>
    %cst_27 = arith.constant 6.250000e-02 : f32
    %68 = vector.broadcast %cst_27 : f32 to vector<1x32xf32>
    %69 = arith.mulf %67, %68 : vector<1x32xf32>
    %70 = vector.broadcast %69 : vector<1x32xf32> to vector<16x32xf32>
    %71 = arith.subf %65, %70 : vector<16x32xf32>
    %72 = arith.mulf %71, %71 : vector<16x32xf32>
    %cst_28 = arith.constant dense<0.000000e+00> : vector<32xf32>
    %73 = vector.multi_reduction <add>, %72, %cst_28 [0] : vector<16x32xf32> to vector<32xf32>
    %74 = vector.shape_cast %73 : vector<32xf32> to vector<1x32xf32>
    %cst_29 = arith.constant 6.250000e-02 : f32
    %75 = vector.broadcast %cst_29 : f32 to vector<1x32xf32>
    %76 = arith.mulf %74, %75 : vector<1x32xf32>
    %cst_30 = arith.constant 9.99999974E-6 : f32
    %77 = vector.broadcast %cst_30 : f32 to vector<1x32xf32>
    %78 = arith.addf %76, %77 : vector<1x32xf32>
    %79 = math.rsqrt %78 : vector<1x32xf32>
    %80 = arith.mulf %3, %79 : vector<1x32xf32>
    %81 = arith.mulf %69, %80 : vector<1x32xf32>
    %82 = arith.subf %4, %81 : vector<1x32xf32>
    %83 = vector.extract_strided_slice %64 {offsets = [0, 7, 0], sizes = [2, 1, 32], strides = [1, 1, 1]} : vector<2x8x32xf32> to vector<2x1x32xf32>
    %84 = vector.shape_cast %83 : vector<2x1x32xf32> to vector<2x32xf32>
    %85 = vector.broadcast %80 : vector<1x32xf32> to vector<2x32xf32>
    %86 = arith.mulf %84, %85 : vector<2x32xf32>
    %87 = vector.broadcast %82 : vector<1x32xf32> to vector<2x32xf32>
    %88 = arith.addf %86, %87 : vector<2x32xf32>
    %c0_31 = arith.constant 0 : index
    %c0_32 = arith.constant 0 : index
    %89 = vector.load %arg4[%c0_31, %c0_32] : memref<32x2xf32, #tpu.memory_space<vmem>>, vector<32x2xf32>
    %cst_33 = arith.constant dense<0.000000e+00> : vector<2x2xf32>
    %90 = tpu.matmul %88, %89, %cst_33 {dimension_numbers = #tpu.dot_dimension_numbers<[1], [0], [0], [1], [0, 0, 1, 1], [], []>} : vector<2x32xf32>, vector<32x2xf32>, vector<2x2xf32> -> vector<2x2xf32>
    %91 = vector.broadcast %5 : vector<1x2xf32> to vector<2x2xf32>
    %92 = arith.addf %90, %91 : vector<2x2xf32>
    %c0_34 = arith.constant 0 : index
    %c0_35 = arith.constant 0 : index
    %93 = vector.load %arg5[%c0_34, %c0_35] : memref<2x2xf32, #tpu.memory_space<vmem>>, vector<2x2xf32>
    tpu.vector_store %arg5[%c0_34, %c0_35], %92 {strides = array<i32>} : memref<2x2xf32, #tpu.memory_space<vmem>>, vector<2x2xf32>,
    return
  }
}

</mosaic_0001>

<llo_original>
// kernel: cnn_forward.1
$region0: #{cnn_forward.1}
  #allocation0 [shape = 'u32[]', space=smem, size = 0x4, offset = 0x4, fixed_abs, tag = 'smem constant byte address 0x4 - core index']
  #allocation1 [shape = 'u32[72,128]{1,0:T(1,128)}', space=vmem, size = 0x9000, scoped, tag = 'internal scratch']
  %s0 = inlined_call_operand.hbm [shape: f32[16,16], index: 0, kind: input, shape index: {}]
  %s1 = inlined_call_operand.hbm [shape: f32[3,16,32], index: 1, kind: input, shape index: {}]
  %s2 = inlined_call_operand.vmem [shape: f32[32,32], index: 2, kind: input, shape index: {}]
  %s3 = inlined_call_operand.hbm [shape: f32[8,32], index: 3, kind: input, shape index: {}]
  %s4 = inlined_call_operand.vmem [shape: f32[32,2], index: 4, kind: input, shape index: {}]
  %s5 = inlined_call_operand.hbm [shape: f32[2,2], index: 5, kind: output, shape index: {}]
  %s6 = sld [smem:[#allocation0]]
  $region42: #{cnn_forward.1} parent=0
    _
  %s8 = ssub.s32 1, %s6
  %s9 = scalar_select 0, %s8, %s6
  $region1: #{cnn_forward.1} parent=0
    #allocation2 [shape = 'u8[8192]{0}', space=vmem, size = 0x2000, scoped, tag = 'input window, operand 0, single buffered']
    #allocation3 [shape = 's32[1]{0}', space=sflag, size = 0x4, scoped, tag = 'scoped memory for cnn_forward.1']
    #allocation4 [shape = 's32[1]{0}', space=sflag, size = 0x4, scoped, tag = 'scoped memory for cnn_forward.1']
    #allocation5 [shape = 'u8[24576]{0}', space=vmem, size = 0x6000, scoped, tag = 'input window, operand 1, single buffered']
    #allocation6 [shape = 's32[1]{0}', space=sflag, size = 0x4, scoped, tag = 'scoped memory for cnn_forward.1']
    #allocation7 [shape = 'u8[4096]{0}', space=vmem, size = 0x1000, scoped, tag = 'input window, operand 3, single buffered']
    #allocation8 [shape = 'u8[1024]{0}', space=vmem, size = 0x400, scoped, tag = 'output window, operand 0, single buffered']
    %10 = vsyncpa [#allocation3], 0
    %11 = vsyncpa [#allocation6], 0
    %12 = vsyncpa [#allocation4], 0
    // Predicated region
    $region2: #{cnn_forward.1} parent=1 // pred_check
      _
    $region3: #{cnn_forward.1} parent=1 // pred_check_branch
      %14 = sbr.rel (0) target = $region5
    $region4: #{cnn_forward.1} parent=1 // pred_region
      %16 = vsyncadd [#allocation3], 0
      %s17 = sshll.u32 %s0, 4
      %s18 = int_to_ptr.hbm [resolvable:$true] %s17
      %s19 = sshll.u32 [#allocation2], 4
      %s20 = int_to_ptr.vmem [resolvable:$true] %s19
      %25 = dma.hbm_to_vmem [thread:$0]  %s18, 256, %s20, [#allocation3], 128, 128, 8
    $region5: #{cnn_forward.1} parent=1 // pred_fallthru
      _
    // Predicated region
    $region6: #{cnn_forward.1} parent=1 // pred_check
      _
    $region7: #{cnn_forward.1} parent=1 // pred_check_branch
      %27 = sbr.rel (0) target = $region9
    $region8: #{cnn_forward.1} parent=1 // pred_region
      %29 = vsyncadd [#allocation6], 0
      %s30 = sshll.u32 %s1, 4
      %s31 = int_to_ptr.hbm [resolvable:$true] %s30
      %s32 = sshll.u32 [#allocation5], 4
      %s33 = int_to_ptr.vmem [resolvable:$true] %s32
      %38 = dma.hbm_to_vmem [thread:$0]  %s31, 768, %s33, [#allocation6], 128, 128, 8
    $region9: #{cnn_forward.1} parent=1 // pred_fallthru
      _
    // Predicated region
    $region10: #{cnn_forward.1} parent=1 // pred_check
      _
    $region11: #{cnn_forward.1} parent=1 // pred_check_branch
      %40 = sbr.rel (0) target = $region13
    $region12: #{cnn_forward.1} parent=1 // pred_region
      _
    $region13: #{cnn_forward.1} parent=1 // pred_fallthru
      _
    // Predicated region
    $region14: #{cnn_forward.1} parent=1 // pred_check
      _
    $region15: #{cnn_forward.1} parent=1 // pred_check_branch
      %42 = sbr.rel (0) target = $region17
    $region16: #{cnn_forward.1} parent=1 // pred_region
      %44 = vsyncadd [#allocation6], 0
      %s46 = sshll.u32 %s3, 4
      %s47 = int_to_ptr.hbm [resolvable:$true] %s46
      %s48 = sshll.u32 [#allocation7], 4
      %s49 = int_to_ptr.vmem [resolvable:$true] %s48
      %51 = dma.hbm_to_vmem [thread:$0]  %s47, 128, %s49, [#allocation6]
    $region17: #{cnn_forward.1} parent=1 // pred_fallthru
      _
    // Predicated region
    $region18: #{cnn_forward.1} parent=1 // pred_check
      _
    $region19: #{cnn_forward.1} parent=1 // pred_check_branch
      %53 = sbr.rel (0) target = $region21
    $region20: #{cnn_forward.1} parent=1 // pred_region
      _
    $region21: #{cnn_forward.1} parent=1 // pred_fallthru
      _
    // Predicated region
    $region22: #{cnn_forward.1} parent=1 // pred_check
      _
    $region23: #{cnn_forward.1} parent=1 // pred_check_branch
      %55 = sbr.rel (0) target = $region25
    $region24: #{cnn_forward.1} parent=1 // pred_region
      %57 = dma.done [#allocation3], 256
    $region25: #{cnn_forward.1} parent=1 // pred_fallthru
      _
    // Predicated region
    $region26: #{cnn_forward.1} parent=1 // pred_check
      _
    $region27: #{cnn_forward.1} parent=1 // pred_check_branch
      %59 = sbr.rel (0) target = $region29
    $region28: #{cnn_forward.1} parent=1 // pred_region
      %61 = dma.done [#allocation6], 768
    $region29: #{cnn_forward.1} parent=1 // pred_fallthru
      _
    // Predicated region
    $region30: #{cnn_forward.1} parent=1 // pred_check
      _
    $region31: #{cnn_forward.1} parent=1 // pred_check_branch
      %63 = sbr.rel (0) target = $region33
    $region32: #{cnn_forward.1} parent=1 // pred_region
      %65 = dma.done [#allocation6], 128
    $region33: #{cnn_forward.1} parent=1 // pred_fallthru
      _
    %v66 = vld [vmem:[#allocation7] sm:$0xff]
    %v67 = vld [vmem:[#allocation2] sm:$0xff]
    %v68 = vld [vmem:[#allocation2 + $0x8] sm:$0xff]
    %v69 = vlaneseq
    %v70 = vshrl.u32 %v69, 7
    %v71 = vadd.s32 %v70, 8
    %vm72 = vcmp.lt.s32.totalorder %v70, 0
    %v73 = vsub.s32 0, %v70
    %v74 = vsel %vm72, %v73, %v70
    %v75 = vshrl.u32 %v74, 3
    %v76 = vand.u32 %v74, 7
    %v77 = vsub.s32 0, %v76
    %v78 = vsel %vm72, %v77, %v76
    %vm79 = vcmp.lt.s32.totalorder %v71, 0
    %v80 = vsub.s32 0, %v71
    %v81 = vsel %vm79, %v80, %v71
    %v82 = vshrl.u32 %v81, 3
    %v83 = vand.u32 %v81, 7
    %v84 = vsub.s32 0, %v83
    %v85 = vsel %vm79, %v84, %v83
    %vm86 = vcmp.ne.s32.totalorder %v78, 0
    %vm87 = vcmp.ne.s32.totalorder %v85, 0
    %vm88 = vcmp.lt.s32.totalorder %v78, 0
    %vm89 = vcmp.lt.s32.totalorder %v85, 0
    %vm90 = vmand %vm88, %vm86
    %vm91 = vmand %vm89, %vm87
    %v92 = vadd.s32 %v78, 8
    %v93 = vadd.s32 %v85, 8
    %v94 = vsel %vm90, %v92, %v78
    %v95 = vsel %vm91, %v93, %v85
    %vm96 = vcmp.eq.s32.totalorder %v94, 0
    %vm97 = vcmp.eq.s32.totalorder %v95, 0
    %v98 = vrot.slane %v67, 7
    %v99 = vrot.slane %v68, 7
    %vm100 = vcmp.lt.s32.totalorder %v70, 1
    %v101 = vsel %vm100, %v98, %v99
    %v102 = vsel %vm100, %v99, %v98
    %v103 = vsel %vm96, 0.0, %v102
    %v104 = vsel %vm97, 0.0, %v101
    %vm105 = vcmp.eq.s32.totalorder %v94, 7
    %vm106 = vcmp.eq.s32.totalorder %v95, 7
    %v107 = vrot.slane %v67, 1
    %v108 = vrot.slane %v68, 1
    %vm109 = vcmp.lt.s32.totalorder %v70, 7
    %v110 = vsel %vm109, %v107, %v108
    %v111 = vsel %vm109, %v108, %v107
    %v112 = vsel %vm105, 0.0, %v110
    %v113 = vsel %vm106, 0.0, %v111
    %v114 = vld [vmem:[#allocation5] sm:$0xff]
    %v115 = vld [vmem:[#allocation5 + $0x8] sm:$0xff]
    %s116 = scalar_lea.vmem [#allocation5], 16
    %v117 = vld [vmem:[%s116] sm:$0xff]
    %v118 = vld [vmem:[%s116 + $0x8] sm:$0xff]
    %vm119 = vcmask 130048
    %v121 = vsel %vm119, %v67, 0
    %v124 = vsel %vm119, %v68, 0
    %126 = vmatpush.msra.mxu0 0.0
    %127 = vmatpush.msra.mxu0 0.0
    %128 = vmatpush.msra.mxu0 0.0
    %129 = vmatpush.msra.mxu0 0.0
    %130 = vmatpush.msra.mxu0 0.0
    %131 = vmatpush.msra.mxu0 0.0
    %132 = vmatpush.msra.mxu0 0.0
    %133 = vmatpush.msra.mxu0 0.0
    %134 = vmatpush.msra.mxu0 0.0
    %135 = vmatpush.msra.mxu0 0.0
    %136 = vmatpush.msra.mxu0 0.0
    %137 = vmatpush.msra.mxu0 0.0
    %138 = vmatpush.msra.mxu0 0.0
    %139 = vmatpush.msra.mxu0 0.0
    %140 = vmatpush.msra.mxu0 %v118
    %141 = vmatpush.msra.mxu0 %v117
    %142 = vmatmul.f32.gmra.mxu0 %v121
    %v143 = vpop.f32.mrf.mxu0
    %v144 = vadd.f32 0.0, %v143
    %145 = vmatmul.f32.gmra.mxu0 %v124
    %v146 = vpop.f32.mrf.mxu0
    %v147 = vadd.f32 0.0, %v146
    %148 = vdwg.mxu0
    %v150 = vsel %vm119, %v103, 0
    %v153 = vsel %vm119, %v104, 0
    %155 = vmatpush.msra.mxu0 0.0
    %156 = vmatpush.msra.mxu0 0.0
    %157 = vmatpush.msra.mxu0 0.0
    %158 = vmatpush.msra.mxu0 0.0
    %159 = vmatpush.msra.mxu0 0.0
    %160 = vmatpush.msra.mxu0 0.0
    %161 = vmatpush.msra.mxu0 0.0
    %162 = vmatpush.msra.mxu0 0.0
    %163 = vmatpush.msra.mxu0 0.0
    %164 = vmatpush.msra.mxu0 0.0
    %165 = vmatpush.msra.mxu0 0.0
    %166 = vmatpush.msra.mxu0 0.0
    %167 = vmatpush.msra.mxu0 0.0
    %168 = vmatpush.msra.mxu0 0.0
    %169 = vmatpush.msra.mxu0 %v115
    %170 = vmatpush.msra.mxu0 %v114
    %171 = vmatmul.f32.gmra.mxu0 %v150
    %v172 = vpop.f32.mrf.mxu0
    %v173 = vadd.f32 %v144, %v172
    %174 = vmatmul.f32.gmra.mxu0 %v153
    %v175 = vpop.f32.mrf.mxu0
    %v176 = vadd.f32 %v147, %v175
    %177 = vdwg.mxu0
    %s178 = scalar_lea.vmem [#allocation5], 32
    %v179 = vld [vmem:[%s178] sm:$0xff]
    %v180 = vld [vmem:[%s178 + $0x8] sm:$0xff]
    %v182 = vsel %vm119, %v112, 0
    %v185 = vsel %vm119, %v113, 0
    %187 = vmatpush.msra.mxu0 0.0
    %188 = vmatpush.msra.mxu0 0.0
    %189 = vmatpush.msra.mxu0 0.0
    %190 = vmatpush.msra.mxu0 0.0
    %191 = vmatpush.msra.mxu0 0.0
    %192 = vmatpush.msra.mxu0 0.0
    %193 = vmatpush.msra.mxu0 0.0
    %194 = vmatpush.msra.mxu0 0.0
    %195 = vmatpush.msra.mxu0 0.0
    %196 = vmatpush.msra.mxu0 0.0
    %197 = vmatpush.msra.mxu0 0.0
    %198 = vmatpush.msra.mxu0 0.0
    %199 = vmatpush.msra.mxu0 0.0
    %200 = vmatpush.msra.mxu0 0.0
    %201 = vmatpush.msra.mxu0 %v180
    %202 = vmatpush.msra.mxu0 %v179
    %203 = vmatmul.f32.gmra.mxu0 %v182
    %v204 = vpop.f32.mrf.mxu0
    %v205 = vadd.f32 0.0, %v204
    %206 = vmatmul.f32.gmra.mxu0 %v185
    %v207 = vpop.f32.mrf.mxu0
    %v208 = vadd.f32 0.0, %v207
    %209 = vdwg.mxu0
    %v210 = vadd.f32 %v173, %v205
    %v211 = vadd.f32 %v176, %v208
    %v212 = vperm.slane %v66, 0
    %v213 = vadd.f32 %v210, %v212
    %v214 = vadd.f32 %v211, %v212
    %v215 = vld [vmem:[%s2] sm:$0xff]
    %v216 = vld [vmem:[%s2 + $0x8] sm:$0xff]
    %v217 = vld [vmem:[%s2 + $0x10] sm:$0xff]
    %v218 = vld [vmem:[%s2 + $0x18] sm:$0xff]
    %v219 = vperm.slane %v66, 1
    %vm220 = vcmask 261120
    %v222 = vsel %vm220, %v213, 0
    %v225 = vsel %vm220, %v214, 0
    %227 = vmatpush.msra.mxu0 0.0
    %228 = vmatpush.msra.mxu0 0.0
    %229 = vmatpush.msra.mxu0 0.0
    %230 = vmatpush.msra.mxu0 0.0
    %231 = vmatpush.msra.mxu0 0.0
    %232 = vmatpush.msra.mxu0 0.0
    %233 = vmatpush.msra.mxu0 0.0
    %234 = vmatpush.msra.mxu0 0.0
    %235 = vmatpush.msra.mxu0 0.0
    %236 = vmatpush.msra.mxu0 0.0
    %237 = vmatpush.msra.mxu0 0.0
    %238 = vmatpush.msra.mxu0 0.0
    %239 = vmatpush.msra.mxu0 %v218
    %240 = vmatpush.msra.mxu0 %v217
    %241 = vmatpush.msra.mxu0 %v216
    %242 = vmatpush.msra.mxu0 %v215
    %243 = vmatmul.f32.gmra.mxu0 %v222
    %v244 = vpop.f32.mrf.mxu0
    %v245 = vadd.f32 %v219, %v244
    %246 = vmatmul.f32.gmra.mxu0 %v225
    %v247 = vpop.f32.mrf.mxu0
    %v248 = vadd.f32 %v219, %v247
    %249 = vdwg.mxu0
    %v251 = vsel %vm220, %v245, 0
    %253 = vmatpush.xpose.msra.mxu0 0.0
    %254 = vmatpush.xpose.msra.mxu0 0.0
    %255 = vmatpush.xpose.msra.mxu0 0.0
    %256 = vmatpush.xpose.msra.mxu0 0.0
    %257 = vmatpush.xpose.msra.mxu0 0.0
    %258 = vmatpush.xpose.msra.mxu0 0.0
    %259 = vmatpush.xpose.msra.mxu0 0.0
    %260 = vmatpush.xpose.msra.mxu0 0.0
    %261 = vmatpush.xpose.msra.mxu0 0.0
    %262 = vmatpush.xpose.msra.mxu0 0.0
    %263 = vmatpush.xpose.msra.mxu0 0.0
    %264 = vmatpush.xpose.msra.mxu0 0.0
    %265 = vmatpush.xpose.msra.mxu0 0.0
    %266 = vmatpush.xpose.msra.mxu0 0.0
    %267 = vmatpush.xpose.msra.mxu0 0.0
    %268 = vmatpush.xpose.msra.mxu0 %v251
    %269 = vmatmul.f32.gmra.mxu0 %v251
    %v270 = vpop.f32.mrf.mxu0
    %v271 = vadd.f32 0.0, %v270
    %272 = vdwg.mxu0
    %v274 = vsel %vm220, %v248, 0
    %276 = vmatpush.xpose.msra.mxu0 0.0
    %277 = vmatpush.xpose.msra.mxu0 0.0
    %278 = vmatpush.xpose.msra.mxu0 0.0
    %279 = vmatpush.xpose.msra.mxu0 0.0
    %280 = vmatpush.xpose.msra.mxu0 0.0
    %281 = vmatpush.xpose.msra.mxu0 0.0
    %282 = vmatpush.xpose.msra.mxu0 0.0
    %283 = vmatpush.xpose.msra.mxu0 0.0
    %284 = vmatpush.xpose.msra.mxu0 0.0
    %285 = vmatpush.xpose.msra.mxu0 0.0
    %286 = vmatpush.xpose.msra.mxu0 0.0
    %287 = vmatpush.xpose.msra.mxu0 0.0
    %288 = vmatpush.xpose.msra.mxu0 0.0
    %289 = vmatpush.xpose.msra.mxu0 0.0
    %290 = vmatpush.xpose.msra.mxu0 0.0
    %291 = vmatpush.xpose.msra.mxu0 %v274
    %292 = vmatmul.f32.gmra.mxu0 %v274
    %v293 = vpop.f32.mrf.mxu0
    %v294 = vadd.f32 0.0, %v293
    %295 = vdwg.mxu0
    %vm296 = vcmask 64512
    %v297 = vsel %vm296, %v271, -inf
    %298 = vmax.xlane.f32.xlu0 %v297
    %v299 = vpop.xlane.xlu0 %298
    %v300 = vsel %vm296, %v294, -inf
    %301 = vmax.xlane.f32.xlu0 %v300
    %v302 = vpop.xlane.xlu0 %301
    %v303 = vsub.f32 %v271, %v299
    %v304 = vsub.f32 %v294, %v302
    %v305 = vmul.f32 %v303, 1.442695
    %v306 = vpow.pop %v305
    %v307 = vmul.f32 %v304, 1.442695
    %v308 = vpow.pop %v307
    %v309 = vsel %vm296, %v306, 0.0
    %310 = vadd.xlane.f32.xlu0 %v309
    %v311 = vpop.xlane.xlu0 %310
    %v312 = vsel %vm296, %v308, 0.0
    %313 = vadd.xlane.f32.xlu0 %v312
    %v314 = vpop.xlane.xlu0 %313
    %v315 = vrcp.pop %v311
    %v316 = vrcp.pop %v314
    %v317 = vmul.f32 %v306, %v315
    %v318 = vmul.f32 %v308, %v316
    %v320 = vsel %vm296, %v317, 0
    %322 = vmatpush.msra.mxu0 0.0
    %323 = vmatpush.msra.mxu0 0.0
    %324 = vmatpush.msra.mxu0 0.0
    %325 = vmatpush.msra.mxu0 0.0
    %326 = vmatpush.msra.mxu0 0.0
    %327 = vmatpush.msra.mxu0 0.0
    %328 = vmatpush.msra.mxu0 0.0
    %329 = vmatpush.msra.mxu0 0.0
    %330 = vmatpush.msra.mxu0 0.0
    %331 = vmatpush.msra.mxu0 0.0
    %332 = vmatpush.msra.mxu0 0.0
    %333 = vmatpush.msra.mxu0 0.0
    %334 = vmatpush.msra.mxu0 0.0
    %335 = vmatpush.msra.mxu0 0.0
    %336 = vmatpush.msra.mxu0 0.0
    %337 = vmatpush.msra.mxu0 %v213
    %338 = vmatmul.f32.gmra.mxu0 %v320
    %v339 = vpop.f32.mrf.mxu0
    %v340 = vadd.f32 0.0, %v339
    %341 = vdwg.mxu0
    %v343 = vsel %vm296, %v318, 0
    %345 = vmatpush.msra.mxu0 0.0
    %346 = vmatpush.msra.mxu0 0.0
    %347 = vmatpush.msra.mxu0 0.0
    %348 = vmatpush.msra.mxu0 0.0
    %349 = vmatpush.msra.mxu0 0.0
    %350 = vmatpush.msra.mxu0 0.0
    %351 = vmatpush.msra.mxu0 0.0
    %352 = vmatpush.msra.mxu0 0.0
    %353 = vmatpush.msra.mxu0 0.0
    %354 = vmatpush.msra.mxu0 0.0
    %355 = vmatpush.msra.mxu0 0.0
    %356 = vmatpush.msra.mxu0 0.0
    %357 = vmatpush.msra.mxu0 0.0
    %358 = vmatpush.msra.mxu0 0.0
    %359 = vmatpush.msra.mxu0 0.0
    %360 = vmatpush.msra.mxu0 %v214
    %361 = vmatmul.f32.gmra.mxu0 %v343
    %v362 = vpop.f32.mrf.mxu0
    %v363 = vadd.f32 0.0, %v362
    %364 = vdwg.mxu0
    %v365 = vsel %vm220, %v340, 0.0
    %v366 = vsel %vm220, %v363, 0.0
    %v367 = vadd.f32 %v365, %v366
    %v368 = vrot.slane %v367, 4
    %v369 = vadd.f32 %v367, %v368
    %v370 = vrot.slane %v369, 2
    %v371 = vadd.f32 %v369, %v370
    %v372 = vrot.slane %v371, 1
    %v373 = vadd.f32 %v371, %v372
    %v374 = vmul.f32 %v373, 0.0625
    %v375 = vsub.f32 %v340, %v374
    %v376 = vsub.f32 %v363, %v374
    %v377 = vmul.f32 %v375, %v375
    %v378 = vmul.f32 %v376, %v376
    %v379 = vsel %vm220, %v377, 0.0
    %v380 = vsel %vm220, %v378, 0.0
    %v381 = vadd.f32 %v379, %v380
    %v382 = vrot.slane %v381, 4
    %v383 = vadd.f32 %v381, %v382
    %v384 = vrot.slane %v383, 2
    %v385 = vadd.f32 %v383, %v384
    %v386 = vrot.slane %v385, 1
    %v387 = vadd.f32 %v385, %v386
    %v388 = vmul.f32 %v387, 0.0625
    %v389 = vadd.f32 %v388, 1e-05
    %v390 = vrsqrt.pop %v389
    %v391 = vmul.f32 %v390, %v389
    %v392 = vmul.f32 %v391, %v390
    %v393 = vmul.f32 0.5, %v392
    %v394 = vsub.f32 1.5, %v393
    %v395 = vmul.f32 %v390, %v394
    %vm396 = vweird.f32 %v389
    %vm397 = vweird.f32 %v390
    %vm398 = vmor %vm396, %vm397
    %v399 = vsel %vm398, %v390, %v395
    %v400 = vmul.f32 %v66, %v399
    %v401 = vmul.f32 %v374, %v400
    %v403 = vrot.slane %v401, 7
    %v405 = vsub.f32 %v66, %v403
    %v406 = vperm.slane %v400, 2
    %v407 = vmul.f32 %v340, %v406
    %v408 = vmul.f32 %v363, %v406
    %v409 = vperm.slane %v405, 3
    %v410 = vadd.f32 %v407, %v409
    %v411 = vadd.f32 %v408, %v409
    %v412 = vld [vmem:[%s4] sm:$0xff]
    %v413 = vld [vmem:[%s4 + $0x8] sm:$0xff]
    %v414 = vld [vmem:[%s4 + $0x10] sm:$0xff]
    %v415 = vld [vmem:[%s4 + $0x18] sm:$0xff]
    %v416 = vperm.slane %v66, 4
    %v419 = vrot.slane %v410, 7
    %v420 = vrot.slane %v411, 6
    %vm421 = vcmask 1041409
    %v422 = vsel %vm421, %v420, %v419
    %v423 = vsel %vm220, %v422, 0
    %425 = vmatpush.msra.mxu0 0.0
    %426 = vmatpush.msra.mxu0 0.0
    %427 = vmatpush.msra.mxu0 0.0
    %428 = vmatpush.msra.mxu0 0.0
    %429 = vmatpush.msra.mxu0 0.0
    %430 = vmatpush.msra.mxu0 0.0
    %431 = vmatpush.msra.mxu0 0.0
    %432 = vmatpush.msra.mxu0 0.0
    %433 = vmatpush.msra.mxu0 0.0
    %434 = vmatpush.msra.mxu0 0.0
    %435 = vmatpush.msra.mxu0 0.0
    %436 = vmatpush.msra.mxu0 0.0
    %437 = vmatpush.msra.mxu0 %v415
    %438 = vmatpush.msra.mxu0 %v414
    %439 = vmatpush.msra.mxu0 %v413
    %440 = vmatpush.msra.mxu0 %v412
    %441 = vmatmul.f32.gmra.mxu0 %v423
    %v442 = vpop.f32.mrf.mxu0
    %v443 = vadd.f32 %v416, %v442
    %444 = vdwg.mxu0
    %vm445 = vcmask 9216
    %446 = vst.msk [vmem:[#allocation8] sm:$0x3] %vm445, %v443
    // Predicated region
    $region34: #{cnn_forward.1} parent=1 // pred_check
      _
    $region35: #{cnn_forward.1} parent=1 // pred_check_branch
      %448 = sbr.rel (0) target = $region37
    $region36: #{cnn_forward.1} parent=1 // pred_region
      %450 = vsyncadd [#allocation4], 0
      %s452 = sshll.u32 [#allocation8], 4
      %s453 = int_to_ptr.vmem [resolvable:$true] %s452
      %s454 = sshll.u32 %s5, 4
      %s455 = int_to_ptr.hbm [resolvable:$true] %s454
      %457 = dma.vmem_to_hbm [thread:$0]  %s453, 32, %s455, [#allocation4]
    $region37: #{cnn_forward.1} parent=1 // pred_fallthru
      _
    // Predicated region
    $region38: #{cnn_forward.1} parent=1 // pred_check
      _
    $region39: #{cnn_forward.1} parent=1 // pred_check_branch
      %459 = sbr.rel (0) target = $region41
    $region40: #{cnn_forward.1} parent=1 // pred_region
      %461 = dma.done [#allocation4], 32
    $region41: #{cnn_forward.1} parent=1 // pred_fallthru
      _
    %462 = vsyncpa [#allocation3], 1
    %463 = vsyncpa [#allocation6], 1
    %464 = vsyncpa [#allocation4], 1

</llo_original>
